<compile_context>
chip_gen: v5e
topology: v5e:2x2
jax: 0.10.0
libtpu: 0.0.40
codegen_flags: <defaults>
</compile_context>

<pallas_src>
import functools

import jax
import jax.numpy as jnp
from jax import lax
from jax.experimental import pallas as pl
from jax.experimental.pallas import tpu as pltpu


def _self_attention_kernel(x_ref, wqkv_ref, wo_ref, bout_ref, o_ref, acc_ref,
                           *, dim_head, compute_dtype):
    """One grid step = (one batch, one head).

    acc_ref (f32 VMEM scratch, (N, DIM)) carries
        x + b_out + sum_h softmax(q_h k_h^T) v_h @ w_out[h]
    across the head (reduction) axis.
    """
    h = pl.program_id(1)
    x = x_ref[0]                                            # (N, DIM)

    @pl.when(h == 0)
    def _():
        # Residual + output bias folded into the accumulator once per batch.
        acc_ref[...] = x.astype(jnp.float32) + bout_ref[...].astype(jnp.float32)

    xm = x.astype(compute_dtype)

    # Fused per-head QKV projection: one MXU matmul against packed (DIM, 3*Dh).
    # Softmax scale is pre-folded into the Q columns (wrapper-side, one time).
    qkv = jnp.dot(xm, wqkv_ref[0], preferred_element_type=jnp.float32)   # (N, 3*Dh)
    q = qkv[:, :dim_head].astype(compute_dtype)
    k = qkv[:, dim_head:2 * dim_head].astype(compute_dtype)
    v = qkv[:, 2 * dim_head:].astype(compute_dtype)

    # Q . K^T contracting the last axes (no materialized transpose).
    dots = lax.dot_general(q, k, (((1,), (1,)), ((), ())),
                           preferred_element_type=jnp.float32)           # (N, N)

    # Numerically stable softmax in f32; denominator via EUP approx reciprocal.
    # TODO(synk): for production N >~ 1-2K, tile the key axis with an online
    # softmax (running max/denominator) instead of materializing (N, N).
    m = jnp.max(dots, axis=-1, keepdims=True)
    p = jnp.exp(dots - m)
    denom = jnp.sum(p, axis=-1, keepdims=True)
    attn = p * pl.reciprocal(denom, approx=True)

    outh = jnp.dot(attn.astype(compute_dtype), v,
                   preferred_element_type=jnp.float32)                   # (N, Dh)

    # Per-head output projection accumulated straight into (N, DIM).
    acc_ref[...] += jnp.dot(outh.astype(compute_dtype), wo_ref[0],
                            preferred_element_type=jnp.float32)

    @pl.when(h == pl.num_programs(1) - 1)
    def _():
        o_ref[0] = acc_ref[...].astype(o_ref.dtype)


def self_attention(x, w_qkv, w_out, b_out, *, heads, dim_head,
                   compute_dtype=jnp.bfloat16):
    """x: (B, N, DIM) -> (B, N, DIM). Matches SelfAttention.forward (dropout=0)."""
    B, N, DIM = x.shape
    inner = heads * dim_head
    assert w_qkv.shape == (DIM, 3 * inner)
    assert w_out.shape == (inner, DIM)
    assert b_out.shape == (DIM,)
    # TODO(synk): the heads==1 and dim_head==dim 'Identity' to_out branch of the
    # PyTorch module is not specialized here; this wrapper always applies w_out+b_out.
    scale = float(dim_head) ** (-0.5)

    # One-time wrapper-side weight preprocessing:
    #  - split QKV columns per head and fold the softmax scale into Q,
    #  - pack per-head [Q|K|V] into a single (heads, DIM, 3*Dh) operand so each
    #    grid step does ONE lane-dense MXU projection,
    #  - split the output projection per head -> (heads, Dh, DIM),
    #  - cast MXU operands to compute_dtype ONCE (no per-step VPU casts of weights).
    wq, wk, wv = jnp.split(w_qkv, 3, axis=-1)                        # (DIM, inner) each

    def per_head(w):
        return w.reshape(DIM, heads, dim_head).transpose(1, 0, 2)    # (heads, DIM, Dh)

    wqkv_h = jnp.concatenate(
        [per_head(wq) * scale, per_head(wk), per_head(wv)],
        axis=-1).astype(compute_dtype)                               # (heads, DIM, 3*Dh)
    wo_h = w_out.reshape(heads, dim_head, DIM).astype(compute_dtype)  # (heads, Dh, DIM)
    bout = b_out.reshape(1, DIM)                                      # kept f32

    kernel = functools.partial(_self_attention_kernel,
                               dim_head=dim_head, compute_dtype=compute_dtype)

    # Per-step VMEM working-set estimate (double-buffered x/out blocks + weights
    # + f32 accumulator + f32 score/prob buffers), with headroom; capped at
    # 48 MiB so it stays inside v7x's 64 MiB physical VMEM.
    x_bytes = x.dtype.itemsize
    w_bytes = jnp.dtype(compute_dtype).itemsize
    est = (2 * N * DIM * x_bytes                                  # x blocks
           + 2 * N * DIM * x_bytes                                # out blocks
           + 2 * (DIM * 3 * dim_head + dim_head * DIM) * w_bytes  # weight blocks
           + N * DIM * 4                                          # f32 acc scratch
           + 3 * N * N * 4                                        # dots / p / attn
           + 2 * N * 3 * dim_head * 4)                            # qkv intermediates
    vmem_limit = int(min(48 * 1024 * 1024, max(4 * est, 32 * 1024 * 1024)))

    out = pl.pallas_call(
        kernel,
        out_shape=jax.ShapeDtypeStruct((B, N, DIM), x.dtype),
        grid_spec=pltpu.PrefetchScalarGridSpec(
            num_scalar_prefetch=0,
            grid=(B, heads),                                      # (parallel, reduction)
            in_specs=[
                pl.BlockSpec((1, N, DIM), lambda b, h: (b, 0, 0)),
                pl.BlockSpec((1, DIM, 3 * dim_head), lambda b, h: (h, 0, 0)),
                pl.BlockSpec((1, dim_head, DIM), lambda b, h: (h, 0, 0)),
                pl.BlockSpec((1, DIM), lambda b, h: (0, 0)),
            ],
            # Same output block across the head axis -> resident accumulator;
            # lane width is DIM (>=128 and lane-dense in production configs).
            out_specs=pl.BlockSpec((1, N, DIM), lambda b, h: (b, 0, 0)),
            scratch_shapes=[pltpu.VMEM((N, DIM), jnp.float32)],
        ),
        compiler_params=pltpu.CompilerParams(
            dimension_semantics=("parallel", "arbitrary"),
            vmem_limit_bytes=vmem_limit),
    )(x, wqkv_h, wo_h, bout)

    return out


def _reference(x, w_qkv, w_out, b_out, *, heads, dim_head):
    """Plain-JAX reference matching the PyTorch forward (dropout=0)."""
    B, N, DIM = x.shape
    inner = heads * dim_head
    scale = float(dim_head) ** (-0.5)
    qkv = x @ w_qkv
    q, k, v = jnp.split(qkv, 3, axis=-1)

    def to_heads(t):
        return t.reshape(B, N, heads, dim_head).transpose(0, 2, 1, 3)  # b h n d

    q, k, v = map(to_heads, (q, k, v))
    dots = jnp.einsum('bhid,bhjd->bhij', q, k) * scale
    attn = jax.nn.softmax(dots, axis=-1)
    out = jnp.einsum('bhij,bhjd->bhid', attn, v)
    out = out.transpose(0, 2, 1, 3).reshape(B, N, inner)
    return out @ w_out + b_out + x


if __name__ == "__main__":
    # Small shapes consistent with the module's forward: (b, n, dim).
    B, N, DIM = 2, 8, 32
    HEADS, DIM_HEAD = 2, 16          # inner_dim = 32, project_out = True
    INNER = HEADS * DIM_HEAD

    key = jax.random.PRNGKey(0)
    kx, kq, ko, kb = jax.random.split(key, 4)
    x = jax.random.normal(kx, (B, N, DIM), dtype=jnp.float32)
    # Deterministic synthetic weights (nn.Linear-shaped, stored as (in, out)).
    w_qkv = jax.random.normal(kq, (DIM, 3 * INNER), dtype=jnp.float32) * 0.05
    w_out = jax.random.normal(ko, (INNER, DIM), dtype=jnp.float32) * 0.05
    b_out = jax.random.normal(kb, (DIM,), dtype=jnp.float32) * 0.05

    y_ref = _reference(x, w_qkv, w_out, b_out, heads=HEADS, dim_head=DIM_HEAD)

    # f32 MXU operands: tight numerics (structural check).
    y32 = self_attention(x, w_qkv, w_out, b_out, heads=HEADS, dim_head=DIM_HEAD,
                         compute_dtype=jnp.float32)
    y32 = jax.block_until_ready(y32)
    assert jnp.allclose(y32, y_ref, atol=1e-3, rtol=1e-3), "f32 mismatch vs reference"

    # bf16 MXU operands (production default): flash-attention-level error only.
    y16 = self_attention(x, w_qkv, w_out, b_out, heads=HEADS, dim_head=DIM_HEAD,
                         compute_dtype=jnp.bfloat16)
    y16 = jax.block_until_ready(y16)
    assert jnp.allclose(y16, y_ref, atol=3e-2, rtol=3e-2), "bf16 mismatch vs reference"

    print("KERNEL_OK")
</pallas_src>

<mosaic_0001>
module attributes {stable_mosaic.version = 11 : i64} {
  func.func @_self_attention_kernel(%arg0: i32, %arg1: i32, %arg2: memref<1x8x32xf32, #tpu.memory_space<vmem>>, %arg3: memref<1x32x48xf32, #tpu.memory_space<vmem>>, %arg4: memref<1x16x32xf32, #tpu.memory_space<vmem>>, %arg5: memref<1x32xf32, #tpu.memory_space<vmem>>, %arg6: memref<1x8x32xf32, #tpu.memory_space<vmem>>, %arg7: memref<8x32xf32, #tpu.memory_space<vmem>>) attributes {dimension_semantics = [#tpu.dimension_semantics<parallel>, #tpu.dimension_semantics<arbitrary>], iteration_bounds = array<i64: 2, 2>, scalar_prefetch = 0 : i64, scratch_operands = 1 : i64, tpu.core_type = #tpu.core_type<tc>, window_params = [{transform_indices = @transform_0, window_bounds = array<i64: 1, 8, 32>}, {transform_indices = @transform_1, window_bounds = array<i64: 1, 32, 48>}, {transform_indices = @transform_2, window_bounds = array<i64: 1, 16, 32>}, {pipeline_mode = #tpu.pipeline_mode<synchronous>, transform_indices = @transform_3, window_bounds = array<i64: 1, 32>}, {transform_indices = @transform_4, window_bounds = array<i64: 1, 8, 32>}]} {
    %c0 = arith.constant 0 : index
    %c0_0 = arith.constant 0 : index
    %c0_1 = arith.constant 0 : index
    %0 = vector.load %arg2[%c0, %c0_0, %c0_1] : memref<1x8x32xf32, #tpu.memory_space<vmem>>, vector<1x8x32xf32>
    %1 = vector.shape_cast %0 : vector<1x8x32xf32> to vector<8x32xf32>
    %c0_i32 = arith.constant 0 : i32
    %2 = arith.cmpi eq, %arg1, %c0_i32 : i32
    %3 = arith.extui %2 : i1 to i32
    %c0_i32_2 = arith.constant 0 : i32
    %4 = arith.cmpi ne, %3, %c0_i32_2 : i32
    scf.if %4 {
      %c0_19 = arith.constant 0 : index
      %c0_20 = arith.constant 0 : index
      %32 = vector.load %arg5[%c0_19, %c0_20] : memref<1x32xf32, #tpu.memory_space<vmem>>, vector<1x32xf32>
      %33 = vector.broadcast %32 : vector<1x32xf32> to vector<8x32xf32>
      %34 = arith.addf %1, %33 : vector<8x32xf32>
      %c0_21 = arith.constant 0 : index
      %c0_22 = arith.constant 0 : index
      %35 = vector.load %arg7[%c0_21, %c0_22] : memref<8x32xf32, #tpu.memory_space<vmem>>, vector<8x32xf32>
      tpu.vector_store %arg7[%c0_21, %c0_22], %34 {strides = array<i32>} : memref<8x32xf32, #tpu.memory_space<vmem>>, vector<8x32xf32>,
    } else {
    }
    %c0_3 = arith.constant 0 : index
    %c0_4 = arith.constant 0 : index
    %c0_5 = arith.constant 0 : index
    %5 = vector.load %arg3[%c0_3, %c0_4, %c0_5] : memref<1x32x48xf32, #tpu.memory_space<vmem>>, vector<1x32x48xf32>
    %6 = vector.shape_cast %5 : vector<1x32x48xf32> to vector<32x48xf32>
    %cst = arith.constant dense<0.000000e+00> : vector<8x48xf32>
    %7 = tpu.matmul %1, %6, %cst {dimension_numbers = #tpu.dot_dimension_numbers<[1], [0], [0], [1], [0, 0, 1, 1], [], []>} : vector<8x32xf32>, vector<32x48xf32>, vector<8x48xf32> -> vector<8x48xf32>
    %8 = vector.extract_strided_slice %7 {offsets = [0, 0], sizes = [8, 16], strides = [1, 1]} : vector<8x48xf32> to vector<8x16xf32>
    %9 = vector.extract_strided_slice %7 {offsets = [0, 16], sizes = [8, 16], strides = [1, 1]} : vector<8x48xf32> to vector<8x16xf32>
    %10 = vector.extract_strided_slice %7 {offsets = [0, 32], sizes = [8, 16], strides = [1, 1]} : vector<8x48xf32> to vector<8x16xf32>
    %cst_6 = arith.constant dense<0.000000e+00> : vector<8x8xf32>
    %11 = tpu.matmul %8, %9, %cst_6 {dimension_numbers = #tpu.dot_dimension_numbers<[1], [1], [0], [0], [0, 0, 1, 0], [], []>} : vector<8x16xf32>, vector<8x16xf32>, vector<8x8xf32> -> vector<8x8xf32>
    %cst_7 = arith.constant dense<0xFF800000> : vector<8xf32>
    %12 = vector.multi_reduction <maximumf>, %11, %cst_7 [1] : vector<8x8xf32> to vector<8xf32>
    %13 = vector.shape_cast %12 : vector<8xf32> to vector<8x1xf32>
    %14 = vector.broadcast %13 : vector<8x1xf32> to vector<8x8xf32>
    %15 = arith.subf %11, %14 : vector<8x8xf32>
    %16 = math.exp %15 : vector<8x8xf32>
    %cst_8 = arith.constant dense<0.000000e+00> : vector<8xf32>
    %17 = vector.multi_reduction <add>, %16, %cst_8 [1] : vector<8x8xf32> to vector<8xf32>
    %18 = vector.shape_cast %17 : vector<8xf32> to vector<8x1xf32>
    %19 = tpu.reciprocal %18 {approx = true} : vector<8x1xf32> -> vector<8x1xf32>
    %20 = vector.broadcast %19 : vector<8x1xf32> to vector<8x8xf32>
    %21 = arith.mulf %16, %20 : vector<8x8xf32>
    %cst_9 = arith.constant dense<0.000000e+00> : vector<8x16xf32>
    %22 = tpu.matmul %21, %10, %cst_9 {dimension_numbers = #tpu.dot_dimension_numbers<[1], [0], [0], [1], [0, 0, 1, 1], [], []>} : vector<8x8xf32>, vector<8x16xf32>, vector<8x16xf32> -> vector<8x16xf32>
    %c0_10 = arith.constant 0 : index
    %c0_11 = arith.constant 0 : index
    %23 = vector.load %arg7[%c0_10, %c0_11] : memref<8x32xf32, #tpu.memory_space<vmem>>, vector<8x32xf32>
    %c0_12 = arith.constant 0 : index
    %c0_13 = arith.constant 0 : index
    %c0_14 = arith.constant 0 : index
    %24 = vector.load %arg4[%c0_12, %c0_13, %c0_14] : memref<1x16x32xf32, #tpu.memory_space<vmem>>, vector<1x16x32xf32>
    %25 = vector.shape_cast %24 : vector<1x16x32xf32> to vector<16x32xf32>
    %cst_15 = arith.constant dense<0.000000e+00> : vector<8x32xf32>
    %26 = tpu.matmul %22, %25, %cst_15 {dimension_numbers = #tpu.dot_dimension_numbers<[1], [0], [0], [1], [0, 0, 1, 1], [], []>} : vector<8x16xf32>, vector<16x32xf32>, vector<8x32xf32> -> vector<8x32xf32>
    %27 = arith.addf %23, %26 : vector<8x32xf32>
    %c0_16 = arith.constant 0 : index
    %c0_17 = arith.constant 0 : index
    %28 = vector.load %arg7[%c0_16, %c0_17] : memref<8x32xf32, #tpu.memory_space<vmem>>, vector<8x32xf32>
    tpu.vector_store %arg7[%c0_16, %c0_17], %27 {strides = array<i32>} : memref<8x32xf32, #tpu.memory_space<vmem>>, vector<8x32xf32>,
    %c1_i32 = arith.constant 1 : i32
    %29 = arith.cmpi eq, %arg1, %c1_i32 : i32
    %30 = arith.extui %29 : i1 to i32
    %c0_i32_18 = arith.constant 0 : i32
    %31 = arith.cmpi ne, %30, %c0_i32_18 : i32
    scf.if %31 {
      %c0_19 = arith.constant 0 : index
      %c0_20 = arith.constant 0 : index
      %32 = vector.load %arg7[%c0_19, %c0_20] : memref<8x32xf32, #tpu.memory_space<vmem>>, vector<8x32xf32>
      %c0_21 = arith.constant 0 : index
      %c0_22 = arith.constant 0 : index
      %c0_23 = arith.constant 0 : index
      %33 = vector.load %arg6[%c0_21, %c0_22, %c0_23] : memref<1x8x32xf32, #tpu.memory_space<vmem>>, vector<1x8x32xf32>
      %34 = vector.shape_cast %33 : vector<1x8x32xf32> to vector<8x32xf32>
      %35 = vector.shape_cast %32 : vector<8x32xf32> to vector<1x8x32xf32>
      tpu.vector_store %arg6[%c0_21, %c0_22, %c0_23], %35 {strides = array<i32>} : memref<1x8x32xf32, #tpu.memory_space<vmem>>, vector<1x8x32xf32>,
    } else {
    }
    return
  }
  func.func @transform_0(%arg0: i32, %arg1: i32) -> (i32, i32, i32) {
    %c0_i32 = arith.constant 0 : i32
    %c0_i32_0 = arith.constant 0 : i32
    %c0_i32_1 = arith.constant 0 : i32
    return %arg0, %c0_i32, %c0_i32_0 : i32, i32, i32
  }
  func.func @transform_1(%arg0: i32, %arg1: i32) -> (i32, i32, i32) {
    %c0_i32 = arith.constant 0 : i32
    %c0_i32_0 = arith.constant 0 : i32
    %c0_i32_1 = arith.constant 0 : i32
    return %arg1, %c0_i32, %c0_i32_0 : i32, i32, i32
  }
  func.func @transform_2(%arg0: i32, %arg1: i32) -> (i32, i32, i32) {
    %c0_i32 = arith.constant 0 : i32
    %c0_i32_0 = arith.constant 0 : i32
    %c0_i32_1 = arith.constant 0 : i32
    return %arg1, %c0_i32, %c0_i32_0 : i32, i32, i32
  }
  func.func @transform_3(%arg0: i32, %arg1: i32) -> (i32, i32) {
    %c0_i32 = arith.constant 0 : i32
    %c0_i32_0 = arith.constant 0 : i32
    %c0_i32_1 = arith.constant 0 : i32
    return %c0_i32, %c0_i32_0 : i32, i32
  }
  func.func @transform_4(%arg0: i32, %arg1: i32) -> (i32, i32, i32) {
    %c0_i32 = arith.constant 0 : i32
    %c0_i32_0 = arith.constant 0 : i32
    %c0_i32_1 = arith.constant 0 : i32
    return %arg0, %c0_i32, %c0_i32_0 : i32, i32, i32
  }
}

</mosaic_0001>

<llo_original>
// kernel: tpu_custom_call.1
$region0: #{tpu_custom_call.1}
  #allocation0 [shape = 'u32[]', space=smem, size = 0x4, offset = 0x4, fixed_abs, tag = 'smem constant byte address 0x4 - core index']
  #allocation1 [shape = 'u32[72,128]{1,0:T(1,128)}', space=vmem, size = 0x9000, scoped, tag = 'internal scratch']
  #allocation2 [shape = 'f32[8,32]{1,0:T(8,128)}', space=vmem, size = 0x1000, scoped, tag = 'scratch operand']
  %s0 = inlined_call_operand.hbm [shape: f32[2,8,32], index: 0, kind: input, shape index: {}]
  %s1 = inlined_call_operand.hbm [shape: f32[2,32,48], index: 1, kind: input, shape index: {}]
  %s2 = inlined_call_operand.hbm [shape: f32[2,16,32], index: 2, kind: input, shape index: {}]
  %s3 = inlined_call_operand.vmem [shape: f32[1,32], index: 3, kind: input, shape index: {}]
  %s4 = inlined_call_operand.hbm [shape: f32[2,8,32], index: 4, kind: output, shape index: {}]
  %s5 = sld [smem:[#allocation0]]
  $region69: #{tpu_custom_call.1} parent=0
    _
  %s7 = ssub.s32 1, %s5
  %s8 = scalar_select 0, %s7, %s5
  $region1: #{tpu_custom_call.1} parent=0
    #allocation3 [shape = 'u8[8192]{0}', space=vmem, size = 0x2000, scoped, tag = 'input window, operand 0']
    #allocation4 [shape = 's32[2]{0}', space=sflag, size = 0x8, scoped, tag = 'scoped memory for tpu_custom_call.1']
    #allocation5 [shape = 's32[2]{0}', space=sflag, size = 0x8, scoped, tag = 'scoped memory for tpu_custom_call.1']
    #allocation6 [shape = 'u8[32768]{0}', space=vmem, size = 0x8000, scoped, tag = 'input window, operand 1']
    #allocation7 [shape = 's32[2]{0}', space=sflag, size = 0x8, scoped, tag = 'scoped memory for tpu_custom_call.1']
    #allocation8 [shape = 'u8[16384]{0}', space=vmem, size = 0x4000, scoped, tag = 'input window, operand 2']
    #allocation9 [shape = 'u8[8192]{0}', space=vmem, size = 0x2000, scoped, tag = 'output window, operand 0']
    %9 = vsyncpa [#allocation4], 0
    %s10 = scalar_lea.sflag [#allocation4], 1
    %11 = vsyncpa %s10, 0
    %12 = vsyncpa [#allocation7], 0
    %s13 = scalar_lea.sflag [#allocation7], 1
    %14 = vsyncpa %s13, 0
    %15 = vsyncpa [#allocation5], 0
    %s16 = scalar_lea.sflag [#allocation5], 1
    %17 = vsyncpa %s16, 0
    loop: start=0, step=1, limit=6
    $region2: #{tpu_custom_call.1} parent=1 // loop_pre_header
      _
    $region3: #{tpu_custom_call.1} parent=1 // loop_header
      %s19 = sphi 0, %s23
      %p20 = scmp.ge.s32.totalorder %s19, 6
      %s26 = sphi 0, %s38
      %s27 = sphi 0, %s34
      %s28 = sphi 0, %s26
      %s29 = sphi 0, %s27
      %s30 = sphi 0, %s28
      %s31 = sphi 0, %s29
      %s41 = sphi 0, %s43
      %s44 = sphi 0, %s41
      %s45 = sphi 0, %s44
      %s61 = sphi 0, %s45
      %s67 = sphi 0, %s69
      %s70 = sphi 0, %s67
      %s71 = sphi 0, %s70
      %s87 = sphi 0, %s71
      %s93 = sphi 0, %s95
      %s96 = sphi 0, %s93
      %s97 = sphi 0, %s96
      %s113 = sphi 0, %s97
      %s117 = sphi 0, %s117
      %s119 = sphi 0, %s117
      %s120 = sphi 0, %s119
      %s134 = sphi 0, %s120
      %s140 = sphi 0, %s142
      %s143 = sphi 0, %s140
      %s144 = sphi 0, %s143
      %s160 = sphi 0, %s144
    $region4: #{tpu_custom_call.1} parent=1 // loop_header_branch
      %22 = sbr.rel (%p20) target = $region8
    $region5: #{tpu_custom_call.1} parent=1 // loop_body
      %s24 = ssub.s32 %s19, 1
      %s25 = ssub.s32 %s19, 2
      %s32 = sadd.s32 1, %s27
      %p33 = scmp.ge.s32.totalorder %s32, 2
      %s34 = scalar_select %p33, 0, %s32
      %s35 = sadd.s32 1, %s26
      %s36 = scalar_select %p33, %s35, %s26
      %p37 = scmp.ge.s32.totalorder %s36, 2
      %s38 = scalar_select %p37, 0, %s36
      %s39 = ssub.s32 %s26, %s38
      %p40 = scmp.eq.s32.totalorder %s39, 0
      %s42 = sadd.s32 %s41, 1
      %s43 = scalar_select %p40, %s41, %s42
      %p46 = pneg %p40
      %p47 = scmp.eq.s32.totalorder %s19, 3
      %p48 = por %p46, %p47
      %p49 = scmp.ne.s32.totalorder %s41, %s44
      %p50 = scmp.eq.s32.totalorder %s19, 0
      %p51 = por %p49, %p50
      %p52 = scmp.ne.s32.totalorder %s41, %s44
      %p53 = scmp.eq.s32.totalorder %s24, 3
      %p54 = por %p52, %p53
      %p55 = scmp.ne.s32.totalorder %s44, %s45
      %p56 = scmp.eq.s32.totalorder %s24, 0
      %p57 = por %p55, %p56
      %p58 = scmp.ne.s32.totalorder %s44, %s45
      %p59 = scmp.eq.s32.totalorder %s25, 3
      %p60 = por %p58, %p59
      %p62 = scmp.ne.s32.totalorder %s45, %s61
      %p63 = scmp.eq.s32.totalorder %s25, 0
      %p64 = por %p62, %p63
      %s65 = ssub.s32 %s27, %s34
      %p66 = scmp.eq.s32.totalorder %s65, 0
      %s68 = sadd.s32 %s67, 1
      %s69 = scalar_select %p66, %s67, %s68
      %p72 = pneg %p66
      %p73 = scmp.eq.s32.totalorder %s19, 3
      %p74 = por %p72, %p73
      %p75 = scmp.ne.s32.totalorder %s67, %s70
      %p76 = scmp.eq.s32.totalorder %s19, 0
      %p77 = por %p75, %p76
      %p78 = scmp.ne.s32.totalorder %s67, %s70
      %p79 = scmp.eq.s32.totalorder %s24, 3
      %p80 = por %p78, %p79
      %p81 = scmp.ne.s32.totalorder %s70, %s71
      %p82 = scmp.eq.s32.totalorder %s24, 0
      %p83 = por %p81, %p82
      %p84 = scmp.ne.s32.totalorder %s70, %s71
      %p85 = scmp.eq.s32.totalorder %s25, 3
      %p86 = por %p84, %p85
      %p88 = scmp.ne.s32.totalorder %s71, %s87
      %p89 = scmp.eq.s32.totalorder %s25, 0
      %p90 = por %p88, %p89
      %s91 = ssub.s32 %s27, %s34
      %p92 = scmp.eq.s32.totalorder %s91, 0
      %s94 = sadd.s32 %s93, 1
      %s95 = scalar_select %p92, %s93, %s94
      %p98 = pneg %p92
      %p99 = scmp.eq.s32.totalorder %s19, 3
      %p100 = por %p98, %p99
      %p101 = scmp.ne.s32.totalorder %s93, %s96
      %p102 = scmp.eq.s32.totalorder %s19, 0
      %p103 = por %p101, %p102
      %p104 = scmp.ne.s32.totalorder %s93, %s96
      %p105 = scmp.eq.s32.totalorder %s24, 3
      %p106 = por %p104, %p105
      %p107 = scmp.ne.s32.totalorder %s96, %s97
      %p108 = scmp.eq.s32.totalorder %s24, 0
      %p109 = por %p107, %p108
      %p110 = scmp.ne.s32.totalorder %s96, %s97
      %p111 = scmp.eq.s32.totalorder %s25, 3
      %p112 = por %p110, %p111
      %p114 = scmp.ne.s32.totalorder %s97, %s113
      %p115 = scmp.eq.s32.totalorder %s25, 0
      %p116 = por %p114, %p115
      %s118 = sadd.s32 %s117, 1
      %p121 = scmp.eq.s32.totalorder %s19, 3
      %p122 = scmp.ne.s32.totalorder %s117, %s119
      %p123 = scmp.eq.s32.totalorder %s19, 0
      %p124 = por %p122, %p123
      %p125 = scmp.ne.s32.totalorder %s117, %s119
      %p126 = scmp.eq.s32.totalorder %s24, 3
      %p127 = por %p125, %p126
      %p128 = scmp.ne.s32.totalorder %s119, %s120
      %p129 = scmp.eq.s32.totalorder %s24, 0
      %p130 = por %p128, %p129
      %p131 = scmp.ne.s32.totalorder %s119, %s120
      %p132 = scmp.eq.s32.totalorder %s25, 3
      %p133 = por %p131, %p132
      %p135 = scmp.ne.s32.totalorder %s120, %s134
      %p136 = scmp.eq.s32.totalorder %s25, 0
      %p137 = por %p135, %p136
      %s138 = ssub.s32 %s26, %s38
      %p139 = scmp.eq.s32.totalorder %s138, 0
      %s141 = sadd.s32 %s140, 1
      %s142 = scalar_select %p139, %s140, %s141
      %p145 = pneg %p139
      %p146 = scmp.eq.s32.totalorder %s19, 3
      %p147 = por %p145, %p146
      %p148 = scmp.ne.s32.totalorder %s140, %s143
      %p149 = scmp.eq.s32.totalorder %s19, 0
      %p150 = por %p148, %p149
      %p151 = scmp.ne.s32.totalorder %s140, %s143
      %p152 = scmp.eq.s32.totalorder %s24, 3
      %p153 = por %p151, %p152
      %p154 = scmp.ne.s32.totalorder %s143, %s144
      %p155 = scmp.eq.s32.totalorder %s24, 0
      %p156 = por %p154, %p155
      %p157 = scmp.ne.s32.totalorder %s143, %s144
      %p158 = scmp.eq.s32.totalorder %s25, 3
      %p159 = por %p157, %p158
      %p161 = scmp.ne.s32.totalorder %s144, %s160
      %p162 = scmp.eq.s32.totalorder %s25, 0
      %p163 = por %p161, %p162
      %p164 = scmp.le.s32.totalorder 1, %s19
      %p165 = scmp.lt.s32.totalorder %s19, 5
      %p166 = pnand %p164, %p165
      %p167 = pneg %p166
      // Predicated region
      $region9: #{tpu_custom_call.1} parent=5 // pred_check
        _
      $region10: #{tpu_custom_call.1} parent=5 // pred_check_branch
        %169 = sbr.rel (%p166) target = $region12
      $region11: #{tpu_custom_call.1} parent=5 // pred_region
        %s170 = ssub.s32 %s19, 1
        // Predicated region
        $region13: #{tpu_custom_call.1} parent=11 // pred_check
          %p171 = pneg %p130
        $region14: #{tpu_custom_call.1} parent=11 // pred_check_branch
          %173 = sbr.rel (%p171) target = $region16
        $region15: #{tpu_custom_call.1} parent=11 // pred_region
          _
        $region16: #{tpu_custom_call.1} parent=11 // pred_fallthru
          _
      $region12: #{tpu_custom_call.1} parent=5 // pred_fallthru
        _
      %p174 = scmp.lt.s32.totalorder %s19, 4
      // Predicated region
      $region17: #{tpu_custom_call.1} parent=5 // pred_check
        %p175 = pneg %p174
      $region18: #{tpu_custom_call.1} parent=5 // pred_check_branch
        %177 = sbr.rel (%p175) target = $region20
      $region19: #{tpu_custom_call.1} parent=5 // pred_region
        // Predicated region
        $region21: #{tpu_custom_call.1} parent=19 // pred_check
          %p178 = pneg %p51
        $region22: #{tpu_custom_call.1} parent=19 // pred_check_branch
          %180 = sbr.rel (%p178) target = $region24
        $region23: #{tpu_custom_call.1} parent=19 // pred_region
          %s181 = sand.u32 %s41, 1
          %s182 = scalar_lea.sflag [#allocation4], %s181
          %s183 = sand.u32 %s41, 1
          %s184 = smul.addr %s183, 8
          %s185 = scalar_lea.vmem [#allocation3], %s184
          %187 = vsyncadd %s182, 0
          %s188 = smul.addr %s26, 8
          %s189 = scalar_lea.hbm %s0, %s188
          %s191 = sshll.u32 %s189, 4
          %s192 = int_to_ptr.hbm [resolvable:$true] %s191
          %s193 = sshll.u32 %s185, 4
          %s194 = int_to_ptr.vmem [resolvable:$true] %s193
          %196 = dma.hbm_to_vmem [thread:$0]  %s192, 128, %s194, %s182
        $region24: #{tpu_custom_call.1} parent=19 // pred_fallthru
          _
        // Predicated region
        $region25: #{tpu_custom_call.1} parent=19 // pred_check
          %p197 = pneg %p77
        $region26: #{tpu_custom_call.1} parent=19 // pred_check_branch
          %199 = sbr.rel (%p197) target = $region28
        $region27: #{tpu_custom_call.1} parent=19 // pred_region
          %s200 = sand.u32 %s19, 1
          %s201 = scalar_lea.sflag [#allocation7], %s200
          %s202 = sand.u32 %s67, 1
          %s203 = smul.addr %s202, 32
          %s204 = scalar_lea.vmem [#allocation6], %s203
          %206 = vsyncadd %s201, 0
          %s207 = smul.addr %s27, 4
          %s208 = smul.addr %s207, 8
          %s209 = scalar_lea.hbm %s1, %s208
          %s210 = sshll.u32 %s209, 4
          %s211 = int_to_ptr.hbm [resolvable:$true] %s210
          %s212 = sshll.u32 %s204, 4
          %s213 = int_to_ptr.vmem [resolvable:$true] %s212
          %218 = dma.hbm_to_vmem [thread:$0]  %s211, 512, %s213, %s201, 128, 128, 8
        $region28: #{tpu_custom_call.1} parent=19 // pred_fallthru
          _
        // Predicated region
        $region29: #{tpu_custom_call.1} parent=19 // pred_check
          %p219 = pneg %p103
        $region30: #{tpu_custom_call.1} parent=19 // pred_check_branch
          %221 = sbr.rel (%p219) target = $region32
        $region31: #{tpu_custom_call.1} parent=19 // pred_region
          %s222 = sand.u32 %s19, 1
          %s223 = scalar_lea.sflag [#allocation7], %s222
          %s224 = sand.u32 %s93, 1
          %s225 = smul.addr %s224, 16
          %s226 = scalar_lea.vmem [#allocation8], %s225
          %228 = vsyncadd %s223, 0
          %s229 = smul.addr %s27, 2
          %s230 = smul.addr %s229, 8
          %s231 = scalar_lea.hbm %s2, %s230
          %s232 = sshll.u32 %s231, 4
          %s233 = int_to_ptr.hbm [resolvable:$true] %s232
          %s234 = sshll.u32 %s226, 4
          %s235 = int_to_ptr.vmem [resolvable:$true] %s234
          %240 = dma.hbm_to_vmem [thread:$0]  %s233, 256, %s235, %s223, 128, 128, 8
        $region32: #{tpu_custom_call.1} parent=19 // pred_fallthru
          _
      $region20: #{tpu_custom_call.1} parent=5 // pred_fallthru
        _
      %p241 = scmp.le.s32.totalorder 1, %s19
      %p242 = scmp.lt.s32.totalorder %s19, 5
      %p243 = pnand %p241, %p242
      %p244 = pneg %p243
      // Predicated region
      $region33: #{tpu_custom_call.1} parent=5 // pred_check
        _
      $region34: #{tpu_custom_call.1} parent=5 // pred_check_branch
        %246 = sbr.rel (%p243) target = $region36
      $region35: #{tpu_custom_call.1} parent=5 // pred_region
        %s247 = ssub.s32 %s19, 1
        %s248 = sand.u32 %s44, 1
        %s249 = scalar_lea.sflag [#allocation4], %s248
        %s250 = sand.u32 %s44, 1
        %s251 = smul.addr %s250, 8
        %s252 = scalar_lea.vmem [#allocation3], %s251
        // Predicated region
        $region37: #{tpu_custom_call.1} parent=35 // pred_check
          %p253 = pneg %p57
        $region38: #{tpu_custom_call.1} parent=35 // pred_check_branch
          %255 = sbr.rel (%p253) target = $region40
        $region39: #{tpu_custom_call.1} parent=35 // pred_region
          %257 = dma.done %s249, 128
        $region40: #{tpu_custom_call.1} parent=35 // pred_fallthru
          _
        %s258 = sand.u32 %s24, 1
        %s259 = scalar_lea.sflag [#allocation7], %s258
        %s260 = sand.u32 %s70, 1
        %s261 = smul.addr %s260, 32
        %s262 = scalar_lea.vmem [#allocation6], %s261
        // Predicated region
        $region41: #{tpu_custom_call.1} parent=35 // pred_check
          %p263 = pneg %p83
        $region42: #{tpu_custom_call.1} parent=35 // pred_check_branch
          %265 = sbr.rel (%p263) target = $region44
        $region43: #{tpu_custom_call.1} parent=35 // pred_region
          %267 = dma.done %s259, 512
        $region44: #{tpu_custom_call.1} parent=35 // pred_fallthru
          _
        %s268 = sand.u32 %s24, 1
        %s269 = scalar_lea.sflag [#allocation7], %s268
        %s270 = sand.u32 %s96, 1
        %s271 = smul.addr %s270, 16
        %s272 = scalar_lea.vmem [#allocation8], %s271
        // Predicated region
        $region45: #{tpu_custom_call.1} parent=35 // pred_check
          %p273 = pneg %p109
        $region46: #{tpu_custom_call.1} parent=35 // pred_check_branch
          %275 = sbr.rel (%p273) target = $region48
        $region47: #{tpu_custom_call.1} parent=35 // pred_region
          %277 = dma.done %s269, 256
        $region48: #{tpu_custom_call.1} parent=35 // pred_fallthru
          _
        %s278 = sand.u32 %s44, 1
        %s279 = scalar_lea.sflag [#allocation4], %s278
        %s280 = sand.u32 %s44, 1
        %s281 = smul.addr %s280, 8
        %s282 = scalar_lea.vmem [#allocation3], %s281
        %p283 = pneg %p57
        %p284 = pneg %p54
        %s285 = sand.u32 %s24, 1
        %s286 = scalar_lea.sflag [#allocation7], %s285
        %s287 = sand.u32 %s70, 1
        %s288 = smul.addr %s287, 32
        %s289 = scalar_lea.vmem [#allocation6], %s288
        %p290 = pneg %p83
        %p291 = pneg %p80
        %s292 = sand.u32 %s24, 1
        %s293 = scalar_lea.sflag [#allocation7], %s292
        %s294 = sand.u32 %s96, 1
        %s295 = smul.addr %s294, 16
        %s296 = scalar_lea.vmem [#allocation8], %s295
        %p297 = pneg %p109
        %p298 = pneg %p106
        %p299 = pneg %p130
        %p300 = pneg %p127
        %p301 = pneg %p156
        %p302 = pneg %p153
        %s303 = sand.u32 %s143, 1
        %s304 = scalar_lea.sflag [#allocation5], %s303
        %s305 = sand.u32 %s143, 1
        %s306 = smul.addr %s305, 8
        %s307 = scalar_lea.vmem [#allocation9], %s306
        %v308 = vld [vmem:[%s252] sm:$0xff]
        %p309 = scmp.eq.s32.totalorder %s29, 0
        // Predicated region
        $region49: #{tpu_custom_call.1} parent=35 // pred_check
          %p310 = pneg %p309
        $region50: #{tpu_custom_call.1} parent=35 // pred_check_branch
          %312 = sbr.rel (%p310) target = $region52
        $region51: #{tpu_custom_call.1} parent=35 // pred_region
          %v313 = vld [vmem:[%s3] sm:$0x1]
          %v315 = vperm.slane %v313, 0
          %v317 = vadd.f32 %v308, %v315
          %vm318 = vcmask 261120
          %319 = vst.msk [vmem:[#allocation2] sm:$0xff] %vm318, %v317
        $region52: #{tpu_custom_call.1} parent=35 // pred_fallthru
          _
        %v320 = vld [vmem:[%s262] sm:$0xff]
        %v321 = vld [vmem:[%s262 + $0x8] sm:$0xff]
        %v322 = vld [vmem:[%s262 + $0x10] sm:$0xff]
        %v323 = vld [vmem:[%s262 + $0x18] sm:$0xff]
        %vm324 = vcmask 261120
        %v326 = vsel %vm324, %v308, 0
        %328 = vmatpush.msra.mxu0 0.0
        %329 = vmatpush.msra.mxu0 0.0
        %330 = vmatpush.msra.mxu0 0.0
        %331 = vmatpush.msra.mxu0 0.0
        %332 = vmatpush.msra.mxu0 0.0
        %333 = vmatpush.msra.mxu0 0.0
        %334 = vmatpush.msra.mxu0 0.0
        %335 = vmatpush.msra.mxu0 0.0
        %336 = vmatpush.msra.mxu0 0.0
        %337 = vmatpush.msra.mxu0 0.0
        %338 = vmatpush.msra.mxu0 0.0
        %339 = vmatpush.msra.mxu0 0.0
        %340 = vmatpush.msra.mxu0 %v323
        %341 = vmatpush.msra.mxu0 %v322
        %342 = vmatpush.msra.mxu0 %v321
        %343 = vmatpush.msra.mxu0 %v320
        %344 = vmatmul.f32.gmra.mxu0 %v326
        %v345 = vpop.f32.mrf.mxu0
        %v346 = vadd.f32 0.0, %v345
        %347 = vdwg.mxu0
        %349 = vrot.lane.b32.xlu0 %v346, 112
        %v350 = vpop.permute.xlu0 %349
        %vm351 = vcmask 130048
        %v352 = vsel %vm351, %v346, 0
        %v354 = vsel %vm351, %v350, 0
        %356 = vmatpush.xpose.msra.mxu0 0.0
        %357 = vmatpush.xpose.msra.mxu0 0.0
        %358 = vmatpush.xpose.msra.mxu0 0.0
        %359 = vmatpush.xpose.msra.mxu0 0.0
        %360 = vmatpush.xpose.msra.mxu0 0.0
        %361 = vmatpush.xpose.msra.mxu0 0.0
        %362 = vmatpush.xpose.msra.mxu0 0.0
        %363 = vmatpush.xpose.msra.mxu0 0.0
        %364 = vmatpush.xpose.msra.mxu0 0.0
        %365 = vmatpush.xpose.msra.mxu0 0.0
        %366 = vmatpush.xpose.msra.mxu0 0.0
        %367 = vmatpush.xpose.msra.mxu0 0.0
        %368 = vmatpush.xpose.msra.mxu0 0.0
        %369 = vmatpush.xpose.msra.mxu0 0.0
        %370 = vmatpush.xpose.msra.mxu0 0.0
        %371 = vmatpush.xpose.msra.mxu0 %v354
        %372 = vmatmul.f32.gmra.mxu0 %v352
        %v373 = vpop.f32.mrf.mxu0
        %v374 = vadd.f32 0.0, %v373
        %375 = vdwg.mxu0
        %vm376 = vcmask 64512
        %v377 = vsel %vm376, %v374, -inf
        %378 = vmax.xlane.f32.xlu0 %v377
        %v379 = vpop.xlane.xlu0 %378
        %v380 = vsub.f32 %v374, %v379
        %v381 = vmul.f32 %v380, 1.442695
        %v382 = vpow.pop %v381
        %v383 = vsel %vm376, %v382, 0.0
        %384 = vadd.xlane.f32.xlu0 %v383
        %v385 = vpop.xlane.xlu0 %384
        %v386 = vrcp.pop %v385
        %v387 = vmul.f32 %v382, %v386
        %388 = vrot.lane.b32.xlu0 %v346, 96
        %v389 = vpop.permute.xlu0 %388
        %v392 = vsel %vm376, %v387, 0
        %394 = vmatpush.msra.mxu0 0.0
        %395 = vmatpush.msra.mxu0 0.0
        %396 = vmatpush.msra.mxu0 0.0
        %397 = vmatpush.msra.mxu0 0.0
        %398 = vmatpush.msra.mxu0 0.0
        %399 = vmatpush.msra.mxu0 0.0
        %400 = vmatpush.msra.mxu0 0.0
        %401 = vmatpush.msra.mxu0 0.0
        %402 = vmatpush.msra.mxu0 0.0
        %403 = vmatpush.msra.mxu0 0.0
        %404 = vmatpush.msra.mxu0 0.0
        %405 = vmatpush.msra.mxu0 0.0
        %406 = vmatpush.msra.mxu0 0.0
        %407 = vmatpush.msra.mxu0 0.0
        %408 = vmatpush.msra.mxu0 0.0
        %409 = vmatpush.msra.mxu0 %v389
        %410 = vmatmul.f32.gmra.mxu0 %v392
        %v411 = vpop.f32.mrf.mxu0
        %v412 = vadd.f32 0.0, %v411
        %413 = vdwg.mxu0
        %v414 = vld [vmem:[#allocation2] sm:$0xff]
        %v415 = vld [vmem:[%s272] sm:$0xff]
        %v416 = vld [vmem:[%s272 + $0x8] sm:$0xff]
        %v418 = vsel %vm351, %v412, 0
        %420 = vmatpush.msra.mxu0 0.0
        %421 = vmatpush.msra.mxu0 0.0
        %422 = vmatpush.msra.mxu0 0.0
        %423 = vmatpush.msra.mxu0 0.0
        %424 = vmatpush.msra.mxu0 0.0
        %425 = vmatpush.msra.mxu0 0.0
        %426 = vmatpush.msra.mxu0 0.0
        %427 = vmatpush.msra.mxu0 0.0
        %428 = vmatpush.msra.mxu0 0.0
        %429 = vmatpush.msra.mxu0 0.0
        %430 = vmatpush.msra.mxu0 0.0
        %431 = vmatpush.msra.mxu0 0.0
        %432 = vmatpush.msra.mxu0 0.0
        %433 = vmatpush.msra.mxu0 0.0
        %434 = vmatpush.msra.mxu0 %v416
        %435 = vmatpush.msra.mxu0 %v415
        %436 = vmatmul.f32.gmra.mxu0 %v418
        %v437 = vpop.f32.mrf.mxu0
        %v438 = vadd.f32 0.0, %v437
        %439 = vdwg.mxu0
        %v440 = vadd.f32 %v414, %v438
        %441 = vst.msk [vmem:[#allocation2] sm:$0xff] %vm324, %v440
        %p442 = scmp.eq.s32.totalorder %s29, 1
        // Predicated region
        $region53: #{tpu_custom_call.1} parent=35 // pred_check
          %p443 = pneg %p442
        $region54: #{tpu_custom_call.1} parent=35 // pred_check_branch
          %445 = sbr.rel (%p443) target = $region56
        $region55: #{tpu_custom_call.1} parent=35 // pred_region
          %v446 = vld [vmem:[#allocation2] sm:$0xff]
          %447 = vst.msk [vmem:[%s307] sm:$0xff] %vm324, %v446
        $region56: #{tpu_custom_call.1} parent=35 // pred_fallthru
          _
        %s448 = sand.u32 %s143, 1
        %s449 = scalar_lea.sflag [#allocation5], %s448
        %s450 = sand.u32 %s143, 1
        %s451 = smul.addr %s450, 8
        %s452 = scalar_lea.vmem [#allocation9], %s451
        // Predicated region
        $region57: #{tpu_custom_call.1} parent=35 // pred_check
          %p453 = pneg %p153
        $region58: #{tpu_custom_call.1} parent=35 // pred_check_branch
          %455 = sbr.rel (%p453) target = $region60
        $region59: #{tpu_custom_call.1} parent=35 // pred_region
          %457 = vsyncadd %s449, 0
          %s458 = smul.addr %s28, 8
          %s459 = scalar_lea.hbm %s4, %s458
          %s461 = sshll.u32 %s452, 4
          %s462 = int_to_ptr.vmem [resolvable:$true] %s461
          %s463 = sshll.u32 %s459, 4
          %s464 = int_to_ptr.hbm [resolvable:$true] %s463
          %466 = dma.vmem_to_hbm [thread:$0]  %s462, 128, %s464, %s449
        $region60: #{tpu_custom_call.1} parent=35 // pred_fallthru
          _
      $region36: #{tpu_custom_call.1} parent=5 // pred_fallthru
        _
      %p467 = scmp.le.s32.totalorder 2, %s19
      // Predicated region
      $region61: #{tpu_custom_call.1} parent=5 // pred_check
        %p468 = pneg %p467
      $region62: #{tpu_custom_call.1} parent=5 // pred_check_branch
        %470 = sbr.rel (%p468) target = $region64
      $region63: #{tpu_custom_call.1} parent=5 // pred_region
        %s471 = ssub.s32 %s19, 2
        // Predicated region
        $region65: #{tpu_custom_call.1} parent=63 // pred_check
          %p472 = pneg %p159
        $region66: #{tpu_custom_call.1} parent=63 // pred_check_branch
          %474 = sbr.rel (%p472) target = $region68
        $region67: #{tpu_custom_call.1} parent=63 // pred_region
          %s475 = sand.u32 %s144, 1
          %s476 = scalar_lea.sflag [#allocation5], %s475
          %s477 = sand.u32 %s144, 1
          %s478 = smul.addr %s477, 8
          %s479 = scalar_lea.vmem [#allocation9], %s478
          %481 = dma.done %s476, 128
        $region68: #{tpu_custom_call.1} parent=63 // pred_fallthru
          _
      $region64: #{tpu_custom_call.1} parent=5 // pred_fallthru
        _
    $region6: #{tpu_custom_call.1} parent=1 // loop_footer
      %s23 = sadd.s32 1, %s19
    $region7: #{tpu_custom_call.1} parent=1 // loop_footer_branch
      %18 = sbr.rel target = $region3
    $region8: #{tpu_custom_call.1} parent=1 // loop_exit
      _
    %482 = vsyncpa [#allocation4], 1
    %s483 = scalar_lea.sflag [#allocation4], 1
    %484 = vsyncpa %s483, 1
    %485 = vsyncpa [#allocation7], 1
    %s486 = scalar_lea.sflag [#allocation7], 1
    %487 = vsyncpa %s486, 1
    %488 = vsyncpa [#allocation5], 1
    %s489 = scalar_lea.sflag [#allocation5], 1
    %490 = vsyncpa %s489, 1

</llo_original>
